<compile_context>
chip_gen: v7x
topology: tpu7x:2x2x1
jax: 0.10.0
libtpu: 0.0.40
codegen_flags: <defaults>
</compile_context>

<pallas_src>
import functools

import jax
import jax.numpy as jnp
from jax.experimental import pallas as pl
from jax.experimental.pallas import tpu as pltpu

_LANE = 128
_SUBLANE = 8
_VMEM_LIMIT_BYTES = 32 * 1024 * 1024          # safe on v5e / v6e / v7x
_DEFAULT_BLOCK_BUDGET = 4 << 20               # 4 MiB per x block (x2 in, x2 out)


def _per_channel_stats(sum_, sumsq, w, b, rm, rv, *, eps, momentum, numel):
    """Per-channel finalize math. All args are (TC, 1) float32."""
    inv_n = 1.0 / numel
    # PyTorch would produce inf at numel == 1; guard the degenerate case.
    inv_nm1 = 1.0 / (numel - 1) if numel > 1 else 0.0
    mean = sum_ * inv_n
    sumvar = jnp.maximum(sumsq - sum_ * mean, 0.0)      # clamp fp cancellation
    unbias_var = sumvar * inv_nm1
    bias_var = sumvar * inv_n
    inv_std = jax.lax.rsqrt(bias_var + eps)             # EUP slot, off the VALU
    scale = w * inv_std
    shift = b - mean * scale
    new_rm = (1.0 - momentum) * rm + momentum * mean
    new_rv = (1.0 - momentum) * rv + momentum * unbias_var
    return scale, shift, new_rm, new_rv


# ----------------------------- fused single pass -----------------------------
def _bn_fused_kernel(x_ref, w_ref, b_ref, rm_ref, rv_ref,
                     out_ref, new_rm_ref, new_rv_ref,
                     *, eps, momentum, numel):
    x = x_ref[...].astype(jnp.float32)                  # (N, TC, HW)
    xs = jnp.sum(x, axis=0)                             # (TC, HW)  VALU adds
    xq = jnp.sum(x * x, axis=0)
    sum_ = jnp.sum(xs, axis=1, keepdims=True)           # (TC, 1)   XLU reduce
    sumsq = jnp.sum(xq, axis=1, keepdims=True)

    scale, shift, new_rm, new_rv = _per_channel_stats(
        sum_, sumsq,
        w_ref[...].astype(jnp.float32), b_ref[...].astype(jnp.float32),
        rm_ref[...].astype(jnp.float32), rv_ref[...].astype(jnp.float32),
        eps=eps, momentum=momentum, numel=numel)

    out_ref[...] = (x * scale[None] + shift[None]).astype(out_ref.dtype)
    new_rm_ref[...] = new_rm.astype(new_rm_ref.dtype)
    new_rv_ref[...] = new_rv.astype(new_rv_ref.dtype)


# ---------------------- two-pass path (numel is tiled) -----------------------
def _bn_stats_kernel(x_ref, w_ref, b_ref, rm_ref, rv_ref,
                     scale_ref, shift_ref, new_rm_ref, new_rv_ref,
                     sum_acc, sq_acc,
                     *, eps, momentum, numel):
    k = pl.program_id(1)

    @pl.when(k == 0)
    def _():
        sum_acc[...] = jnp.zeros_like(sum_acc)
        sq_acc[...] = jnp.zeros_like(sq_acc)

    x = x_ref[...].astype(jnp.float32)                  # (N, TC, TK)
    xs = jnp.sum(x, axis=0)                             # (TC, TK)
    xq = jnp.sum(x * x, axis=0)
    sum_acc[...] += jnp.sum(xs, axis=1, keepdims=True)
    sq_acc[...] += jnp.sum(xq, axis=1, keepdims=True)

    @pl.when(k == pl.num_programs(1) - 1)
    def _():
        scale, shift, new_rm, new_rv = _per_channel_stats(
            sum_acc[...], sq_acc[...],
            w_ref[...].astype(jnp.float32), b_ref[...].astype(jnp.float32),
            rm_ref[...].astype(jnp.float32), rv_ref[...].astype(jnp.float32),
            eps=eps, momentum=momentum, numel=numel)
        scale_ref[...] = scale
        shift_ref[...] = shift
        new_rm_ref[...] = new_rm.astype(new_rm_ref.dtype)
        new_rv_ref[...] = new_rv.astype(new_rv_ref.dtype)


def _bn_norm_kernel(x_ref, scale_ref, shift_ref, out_ref):
    x = x_ref[...].astype(jnp.float32)                  # (N, TC, TK)
    out_ref[...] = (x * scale_ref[...][None]
                    + shift_ref[...][None]).astype(out_ref.dtype)


# ------------------------------ tile selection --------------------------------
def _channel_tiles(c):
    if c % _SUBLANE != 0:
        return [c]
    return [t for t in range(_SUBLANE, c + 1, _SUBLANE) if c % t == 0]


def _numel_tiles(hw):
    if hw % _LANE != 0:
        return [hw]
    return [t for t in range(_LANE, hw + 1, _LANE) if hw % t == 0]


def _best_fused_tile(n, c, hw, itemsize, budget):
    for tc in reversed(_channel_tiles(c)):              # largest tile first
        if n * tc * hw * itemsize <= budget:
            return tc
    return None


def _best_two_pass_tiles(n, c, hw, itemsize, budget):
    cands = []
    for tc in _channel_tiles(c):
        for tk in _numel_tiles(hw):
            if n * tc * tk * itemsize <= budget:
                # Prefer largest block, tie-break on lane-dense (bigger TK).
                cands.append((n * tc * tk, tk, tc))
    if not cands:
        # TODO(synk): huge N with non-128-multiple H*W can exceed the budget;
        # fall back to the smallest tiles and rely on the raised VMEM limit.
        return _channel_tiles(c)[0], _numel_tiles(hw)[0]
    _, tk, tc = max(cands)
    return tc, tk


# --------------------------------- wrapper -----------------------------------
def batchnorm2d_reimpl(x, weight, bias, running_mean, running_var,
                       eps=1e-5, momentum=0.1,
                       block_budget_bytes=_DEFAULT_BLOCK_BUDGET):
    """Training-mode forward of BatchNorm2dReimpl.

    x: (N, C, H, W). Returns (out_nchw, new_running_mean, new_running_var).
    """
    n, c, h, w = x.shape
    hw = h * w
    numel = n * hw
    itemsize = jnp.dtype(x.dtype).itemsize

    # Free layout change (no data movement): NCHW -> (N, C, H*W).
    x3 = x.reshape(n, c, hw)
    w2 = weight.reshape(c, 1)
    b2 = bias.reshape(c, 1)
    rm2 = running_mean.reshape(c, 1)
    rv2 = running_var.reshape(c, 1)

    cparams_1d = pltpu.CompilerParams(
        dimension_semantics=("parallel",),
        vmem_limit_bytes=_VMEM_LIMIT_BYTES)

    # Prefer the fused single-pass kernel: x read once, out written once.
    fused_tc = _best_fused_tile(n, c, hw, itemsize, block_budget_bytes)

    if fused_tc is not None:
        tc = fused_tc
        kernel = functools.partial(_bn_fused_kernel, eps=eps,
                                   momentum=momentum, numel=numel)
        out3, new_rm, new_rv = pl.pallas_call(
            kernel,
            grid=(c // tc,),
            out_shape=(
                jax.ShapeDtypeStruct((n, c, hw), x.dtype),
                jax.ShapeDtypeStruct((c, 1), running_mean.dtype),
                jax.ShapeDtypeStruct((c, 1), running_var.dtype),
            ),
            in_specs=[
                pl.BlockSpec((n, tc, hw), lambda ci: (0, ci, 0)),
                pl.BlockSpec((tc, 1), lambda ci: (ci, 0)),
                pl.BlockSpec((tc, 1), lambda ci: (ci, 0)),
                pl.BlockSpec((tc, 1), lambda ci: (ci, 0)),
                pl.BlockSpec((tc, 1), lambda ci: (ci, 0)),
            ],
            out_specs=(
                pl.BlockSpec((n, tc, hw), lambda ci: (0, ci, 0)),
                pl.BlockSpec((tc, 1), lambda ci: (ci, 0)),
                pl.BlockSpec((tc, 1), lambda ci: (ci, 0)),
            ),
            compiler_params=cparams_1d,
        )(x3, w2, b2, rm2, rv2)
    else:
        # Two-pass path: tile numel as well; pick the largest lane-dense block.
        tc, tk = _best_two_pass_tiles(n, c, hw, itemsize, block_budget_bytes)
        grid = (c // tc, hw // tk)

        stats_kernel = functools.partial(_bn_stats_kernel, eps=eps,
                                         momentum=momentum, numel=numel)
        scale, shift, new_rm, new_rv = pl.pallas_call(
            stats_kernel,
            grid=grid,
            out_shape=(
                jax.ShapeDtypeStruct((c, 1), jnp.float32),
                jax.ShapeDtypeStruct((c, 1), jnp.float32),
                jax.ShapeDtypeStruct((c, 1), running_mean.dtype),
                jax.ShapeDtypeStruct((c, 1), running_var.dtype),
            ),
            in_specs=[
                pl.BlockSpec((n, tc, tk), lambda ci, k: (0, ci, k)),
                pl.BlockSpec((tc, 1), lambda ci, k: (ci, 0)),
                pl.BlockSpec((tc, 1), lambda ci, k: (ci, 0)),
                pl.BlockSpec((tc, 1), lambda ci, k: (ci, 0)),
                pl.BlockSpec((tc, 1), lambda ci, k: (ci, 0)),
            ],
            out_specs=(
                pl.BlockSpec((tc, 1), lambda ci, k: (ci, 0)),
                pl.BlockSpec((tc, 1), lambda ci, k: (ci, 0)),
                pl.BlockSpec((tc, 1), lambda ci, k: (ci, 0)),
                pl.BlockSpec((tc, 1), lambda ci, k: (ci, 0)),
            ),
            scratch_shapes=[pltpu.VMEM((tc, 1), jnp.float32),
                            pltpu.VMEM((tc, 1), jnp.float32)],
            compiler_params=pltpu.CompilerParams(
                dimension_semantics=("parallel", "arbitrary"),
                vmem_limit_bytes=_VMEM_LIMIT_BYTES),
        )(x3, w2, b2, rm2, rv2)

        out3 = pl.pallas_call(
            _bn_norm_kernel,
            grid=grid,
            out_shape=jax.ShapeDtypeStruct((n, c, hw), x.dtype),
            in_specs=[
                pl.BlockSpec((n, tc, tk), lambda ci, k: (0, ci, k)),
                pl.BlockSpec((tc, 1), lambda ci, k: (ci, 0)),
                pl.BlockSpec((tc, 1), lambda ci, k: (ci, 0)),
            ],
            out_specs=pl.BlockSpec((n, tc, tk), lambda ci, k: (0, ci, k)),
            compiler_params=pltpu.CompilerParams(
                dimension_semantics=("parallel", "parallel"),
                vmem_limit_bytes=_VMEM_LIMIT_BYTES),
        )(x3, scale, shift)

    out = out3.reshape(n, c, h, w)
    return out, new_rm.reshape(c), new_rv.reshape(c)


# -------------------------------- reference ----------------------------------
def _reference(x, weight, bias, running_mean, running_var, eps, momentum):
    n, c, h, w = x.shape
    numel = n * h * w
    xf = x.astype(jnp.float32)
    mean = jnp.mean(xf, axis=(0, 2, 3))
    centered = xf - mean[None, :, None, None]
    bias_var = jnp.mean(centered ** 2, axis=(0, 2, 3))
    unbias_var = bias_var * (numel / (numel - 1))
    inv_std = 1.0 / jnp.sqrt(bias_var + eps)
    out = centered * (inv_std * weight)[None, :, None, None] \
        + bias[None, :, None, None]
    new_rm = (1 - momentum) * running_mean + momentum * mean
    new_rv = (1 - momentum) * running_var + momentum * unbias_var
    return out.astype(x.dtype), new_rm, new_rv


if __name__ == "__main__":
    key = jax.random.PRNGKey(0)
    k1, k2, k3, k4 = jax.random.split(key, 4)

    # --- Case 1: small module-spec shape; exercises the fused single-pass path.
    N, C, H, W = 2, 4, 16, 16
    x = jax.random.normal(k1, (N, C, H, W), dtype=jnp.float32)
    # reset_parameters(): weight ~ uniform[0,1), bias = 0, rm = 0, rv = 1
    weight = jax.random.uniform(k2, (C,), dtype=jnp.float32)
    bias = jnp.zeros((C,), dtype=jnp.float32)
    running_mean = jnp.zeros((C,), dtype=jnp.float32)
    running_var = jnp.ones((C,), dtype=jnp.float32)

    out, new_rm, new_rv = batchnorm2d_reimpl(
        x, weight, bias, running_mean, running_var, eps=1e-5, momentum=0.1)
    jax.block_until_ready((out, new_rm, new_rv))

    ref_out, ref_rm, ref_rv = _reference(
        x, weight, bias, running_mean, running_var, 1e-5, 0.1)
    assert out.shape == (N, C, H, W)
    assert jnp.max(jnp.abs(out - ref_out)) < 1e-4
    assert jnp.max(jnp.abs(new_rm - ref_rm)) < 1e-4
    assert jnp.max(jnp.abs(new_rv - ref_rv)) < 1e-4

    # --- Case 2: force the tiled two-pass path (channel + numel grid with the
    # pl.when accumulator finalize) by shrinking the per-block budget.
    N2, C2, H2, W2 = 2, 16, 32, 32
    x2 = jax.random.normal(k3, (N2, C2, H2, W2), dtype=jnp.float32)
    w2_ = jax.random.uniform(k4, (C2,), dtype=jnp.float32)
    b2_ = jnp.zeros((C2,), dtype=jnp.float32)
    rm2_ = jnp.zeros((C2,), dtype=jnp.float32)
    rv2_ = jnp.ones((C2,), dtype=jnp.float32)

    out2, rm2_new, rv2_new = batchnorm2d_reimpl(
        x2, w2_, b2_, rm2_, rv2_, eps=1e-5, momentum=0.1,
        block_budget_bytes=32 * 1024)
    jax.block_until_ready((out2, rm2_new, rv2_new))

    ref_out2, ref_rm2, ref_rv2 = _reference(
        x2, w2_, b2_, rm2_, rv2_, 1e-5, 0.1)
    assert jnp.max(jnp.abs(out2 - ref_out2)) < 1e-4
    assert jnp.max(jnp.abs(rm2_new - ref_rm2)) < 1e-4
    assert jnp.max(jnp.abs(rv2_new - ref_rv2)) < 1e-4

    print("KERNEL_OK")
</pallas_src>

<mosaic_0001>
module attributes {stable_mosaic.version = 11 : i64} {
  func.func @_bn_fused_kernel(%arg0: i32, %arg1: memref<2x4x256xf32, #tpu.memory_space<vmem>>, %arg2: memref<4x1xf32, #tpu.memory_space<vmem>>, %arg3: memref<4x1xf32, #tpu.memory_space<vmem>>, %arg4: memref<4x1xf32, #tpu.memory_space<vmem>>, %arg5: memref<4x1xf32, #tpu.memory_space<vmem>>, %arg6: memref<2x4x256xf32, #tpu.memory_space<vmem>>, %arg7: memref<4x1xf32, #tpu.memory_space<vmem>>, %arg8: memref<4x1xf32, #tpu.memory_space<vmem>>) attributes {dimension_semantics = [#tpu.dimension_semantics<parallel>], iteration_bounds = array<i64: 1>, scalar_prefetch = 0 : i64, scratch_operands = 0 : i64, tpu.core_type = #tpu.core_type<tc>, window_params = [{transform_indices = @transform_0, window_bounds = array<i64: 2, 4, 256>}, {transform_indices = @transform_1, window_bounds = array<i64: 4, 1>}, {transform_indices = @transform_2, window_bounds = array<i64: 4, 1>}, {transform_indices = @transform_3, window_bounds = array<i64: 4, 1>}, {transform_indices = @transform_4, window_bounds = array<i64: 4, 1>}, {transform_indices = @transform_5, window_bounds = array<i64: 2, 4, 256>}, {transform_indices = @transform_6, window_bounds = array<i64: 4, 1>}, {transform_indices = @transform_7, window_bounds = array<i64: 4, 1>}]} {
    %c0 = arith.constant 0 : index
    %c0_0 = arith.constant 0 : index
    %c0_1 = arith.constant 0 : index
    %0 = vector.load %arg1[%c0, %c0_0, %c0_1] : memref<2x4x256xf32, #tpu.memory_space<vmem>>, vector<2x4x256xf32>
    %cst = arith.constant dense<0.000000e+00> : vector<4x256xf32>
    %1 = vector.multi_reduction <add>, %0, %cst [0] : vector<2x4x256xf32> to vector<4x256xf32>
    %2 = arith.mulf %0, %0 : vector<2x4x256xf32>
    %cst_2 = arith.constant dense<0.000000e+00> : vector<4x256xf32>
    %3 = vector.multi_reduction <add>, %2, %cst_2 [0] : vector<2x4x256xf32> to vector<4x256xf32>
    %cst_3 = arith.constant dense<0.000000e+00> : vector<4xf32>
    %4 = vector.multi_reduction <add>, %1, %cst_3 [1] : vector<4x256xf32> to vector<4xf32>
    %5 = vector.shape_cast %4 : vector<4xf32> to vector<4x1xf32>
    %cst_4 = arith.constant dense<0.000000e+00> : vector<4xf32>
    %6 = vector.multi_reduction <add>, %3, %cst_4 [1] : vector<4x256xf32> to vector<4xf32>
    %7 = vector.shape_cast %6 : vector<4xf32> to vector<4x1xf32>
    %c0_5 = arith.constant 0 : index
    %c0_6 = arith.constant 0 : index
    %8 = vector.load %arg2[%c0_5, %c0_6] : memref<4x1xf32, #tpu.memory_space<vmem>>, vector<4x1xf32>
    %c0_7 = arith.constant 0 : index
    %c0_8 = arith.constant 0 : index
    %9 = vector.load %arg3[%c0_7, %c0_8] : memref<4x1xf32, #tpu.memory_space<vmem>>, vector<4x1xf32>
    %c0_9 = arith.constant 0 : index
    %c0_10 = arith.constant 0 : index
    %10 = vector.load %arg4[%c0_9, %c0_10] : memref<4x1xf32, #tpu.memory_space<vmem>>, vector<4x1xf32>
    %c0_11 = arith.constant 0 : index
    %c0_12 = arith.constant 0 : index
    %11 = vector.load %arg5[%c0_11, %c0_12] : memref<4x1xf32, #tpu.memory_space<vmem>>, vector<4x1xf32>
    %cst_13 = arith.constant 0.001953125 : f32
    %12 = vector.broadcast %cst_13 : f32 to vector<4x1xf32>
    %13 = arith.mulf %5, %12 : vector<4x1xf32>
    %14 = arith.mulf %5, %13 : vector<4x1xf32>
    %15 = arith.subf %7, %14 : vector<4x1xf32>
    %cst_14 = arith.constant 0.000000e+00 : f32
    %16 = vector.broadcast %cst_14 : f32 to vector<4x1xf32>
    %17 = arith.maximumf %15, %16 : vector<4x1xf32>
    %cst_15 = arith.constant 0.00195694715 : f32
    %18 = vector.broadcast %cst_15 : f32 to vector<4x1xf32>
    %19 = arith.mulf %17, %18 : vector<4x1xf32>
    %cst_16 = arith.constant 0.001953125 : f32
    %20 = vector.broadcast %cst_16 : f32 to vector<4x1xf32>
    %21 = arith.mulf %17, %20 : vector<4x1xf32>
    %cst_17 = arith.constant 9.99999974E-6 : f32
    %22 = vector.broadcast %cst_17 : f32 to vector<4x1xf32>
    %23 = arith.addf %21, %22 : vector<4x1xf32>
    %24 = math.rsqrt %23 : vector<4x1xf32>
    %25 = arith.mulf %8, %24 : vector<4x1xf32>
    %26 = arith.mulf %13, %25 : vector<4x1xf32>
    %27 = arith.subf %9, %26 : vector<4x1xf32>
    %cst_18 = arith.constant 0.899999976 : f32
    %28 = vector.broadcast %cst_18 : f32 to vector<4x1xf32>
    %29 = arith.mulf %28, %10 : vector<4x1xf32>
    %cst_19 = arith.constant 1.000000e-01 : f32
    %30 = vector.broadcast %cst_19 : f32 to vector<4x1xf32>
    %31 = arith.mulf %30, %13 : vector<4x1xf32>
    %32 = arith.addf %29, %31 : vector<4x1xf32>
    %cst_20 = arith.constant 0.899999976 : f32
    %33 = vector.broadcast %cst_20 : f32 to vector<4x1xf32>
    %34 = arith.mulf %33, %11 : vector<4x1xf32>
    %cst_21 = arith.constant 1.000000e-01 : f32
    %35 = vector.broadcast %cst_21 : f32 to vector<4x1xf32>
    %36 = arith.mulf %35, %19 : vector<4x1xf32>
    %37 = arith.addf %34, %36 : vector<4x1xf32>
    %38 = vector.shape_cast %25 : vector<4x1xf32> to vector<1x4x1xf32>
    %39 = vector.broadcast %38 : vector<1x4x1xf32> to vector<2x4x256xf32>
    %40 = arith.mulf %0, %39 : vector<2x4x256xf32>
    %41 = vector.shape_cast %27 : vector<4x1xf32> to vector<1x4x1xf32>
    %42 = vector.broadcast %41 : vector<1x4x1xf32> to vector<2x4x256xf32>
    %43 = arith.addf %40, %42 : vector<2x4x256xf32>
    %c0_22 = arith.constant 0 : index
    %c0_23 = arith.constant 0 : index
    %c0_24 = arith.constant 0 : index
    %44 = vector.load %arg6[%c0_22, %c0_23, %c0_24] : memref<2x4x256xf32, #tpu.memory_space<vmem>>, vector<2x4x256xf32>
    tpu.vector_store %arg6[%c0_22, %c0_23, %c0_24], %43 {strides = array<i32>} : memref<2x4x256xf32, #tpu.memory_space<vmem>>, vector<2x4x256xf32>,
    %c0_25 = arith.constant 0 : index
    %c0_26 = arith.constant 0 : index
    %45 = vector.load %arg7[%c0_25, %c0_26] : memref<4x1xf32, #tpu.memory_space<vmem>>, vector<4x1xf32>
    tpu.vector_store %arg7[%c0_25, %c0_26], %32 {strides = array<i32>} : memref<4x1xf32, #tpu.memory_space<vmem>>, vector<4x1xf32>,
    %c0_27 = arith.constant 0 : index
    %c0_28 = arith.constant 0 : index
    %46 = vector.load %arg8[%c0_27, %c0_28] : memref<4x1xf32, #tpu.memory_space<vmem>>, vector<4x1xf32>
    tpu.vector_store %arg8[%c0_27, %c0_28], %37 {strides = array<i32>} : memref<4x1xf32, #tpu.memory_space<vmem>>, vector<4x1xf32>,
    return
  }
  func.func @transform_0(%arg0: i32) -> (i32, i32, i32) {
    %c0_i32 = arith.constant 0 : i32
    %c0_i32_0 = arith.constant 0 : i32
    %c0_i32_1 = arith.constant 0 : i32
    return %c0_i32, %arg0, %c0_i32_0 : i32, i32, i32
  }
  func.func @transform_1(%arg0: i32) -> (i32, i32) {
    %c0_i32 = arith.constant 0 : i32
    %c0_i32_0 = arith.constant 0 : i32
    return %arg0, %c0_i32 : i32, i32
  }
  func.func @transform_2(%arg0: i32) -> (i32, i32) {
    %c0_i32 = arith.constant 0 : i32
    %c0_i32_0 = arith.constant 0 : i32
    return %arg0, %c0_i32 : i32, i32
  }
  func.func @transform_3(%arg0: i32) -> (i32, i32) {
    %c0_i32 = arith.constant 0 : i32
    %c0_i32_0 = arith.constant 0 : i32
    return %arg0, %c0_i32 : i32, i32
  }
  func.func @transform_4(%arg0: i32) -> (i32, i32) {
    %c0_i32 = arith.constant 0 : i32
    %c0_i32_0 = arith.constant 0 : i32
    return %arg0, %c0_i32 : i32, i32
  }
  func.func @transform_5(%arg0: i32) -> (i32, i32, i32) {
    %c0_i32 = arith.constant 0 : i32
    %c0_i32_0 = arith.constant 0 : i32
    %c0_i32_1 = arith.constant 0 : i32
    return %c0_i32, %arg0, %c0_i32_0 : i32, i32, i32
  }
  func.func @transform_6(%arg0: i32) -> (i32, i32) {
    %c0_i32 = arith.constant 0 : i32
    %c0_i32_0 = arith.constant 0 : i32
    return %arg0, %c0_i32 : i32, i32
  }
  func.func @transform_7(%arg0: i32) -> (i32, i32) {
    %c0_i32 = arith.constant 0 : i32
    %c0_i32_0 = arith.constant 0 : i32
    return %arg0, %c0_i32 : i32, i32
  }
}

</mosaic_0001>

<llo_original>
// kernel: tpu_custom_call.1
$region0: #{tpu_custom_call.1}
  #allocation0 [shape = 'u32[]', space=smem, size = 0x4, offset = 0x4, fixed_abs, tag = 'smem constant byte address 0x4 - core index']
  #allocation1 [shape = 'u32[144,128]{1,0:T(1,128)}', space=vmem, size = 0x12000, scoped, tag = 'internal scratch']
  %s0 = inlined_call_operand.vmem [shape: f32[2,4,256], index: 0, kind: input, shape index: {}]
  %s1 = inlined_call_operand.vmem [shape: f32[4,1], index: 1, kind: input, shape index: {}]
  %s2 = inlined_call_operand.vmem [shape: f32[4,1], index: 2, kind: input, shape index: {}]
  %s3 = inlined_call_operand.vmem [shape: f32[4,1], index: 3, kind: input, shape index: {}]
  %s4 = inlined_call_operand.vmem [shape: f32[4,1], index: 4, kind: input, shape index: {}]
  %s5 = inlined_call_operand.hbm [shape: f32[2,4,256], index: 5, kind: output, shape index: {0}]
  %s6 = inlined_call_operand.vmem [shape: f32[4,1], index: 6, kind: output, shape index: {1}]
  %s7 = inlined_call_operand.vmem [shape: f32[4,1], index: 7, kind: output, shape index: {2}]
  %8 = xla_tuple %s5, %s6, %s7
  %s9 = sld [smem:[#allocation0]]
  $region46: #{tpu_custom_call.1} parent=0
    _
  %s11 = ssub.s32 1, %s9
  %s12 = scalar_select 0, %s11, %s9
  $region1: #{tpu_custom_call.1} parent=0
    #allocation2 [shape = 'u8[8192]{0}', space=vmem, size = 0x2000, scoped, tag = 'output window, operand 0, single buffered']
    #allocation3 [shape = 's32[1]{0}', space=sflag, size = 0x4, scoped, tag = 'scoped memory for tpu_custom_call.1']
    %13 = vsyncpa [#allocation3], 0
    // Predicated region
    $region2: #{tpu_custom_call.1} parent=1 // pred_check
      _
    $region3: #{tpu_custom_call.1} parent=1 // pred_check_branch
      %15 = sbr.rel (0) target = $region5
    $region4: #{tpu_custom_call.1} parent=1 // pred_region
      _
    $region5: #{tpu_custom_call.1} parent=1 // pred_fallthru
      _
    // Predicated region
    $region6: #{tpu_custom_call.1} parent=1 // pred_check
      _
    $region7: #{tpu_custom_call.1} parent=1 // pred_check_branch
      %17 = sbr.rel (0) target = $region9
    $region8: #{tpu_custom_call.1} parent=1 // pred_region
      _
    $region9: #{tpu_custom_call.1} parent=1 // pred_fallthru
      _
    // Predicated region
    $region10: #{tpu_custom_call.1} parent=1 // pred_check
      _
    $region11: #{tpu_custom_call.1} parent=1 // pred_check_branch
      %19 = sbr.rel (0) target = $region13
    $region12: #{tpu_custom_call.1} parent=1 // pred_region
      _
    $region13: #{tpu_custom_call.1} parent=1 // pred_fallthru
      _
    // Predicated region
    $region14: #{tpu_custom_call.1} parent=1 // pred_check
      _
    $region15: #{tpu_custom_call.1} parent=1 // pred_check_branch
      %21 = sbr.rel (0) target = $region17
    $region16: #{tpu_custom_call.1} parent=1 // pred_region
      _
    $region17: #{tpu_custom_call.1} parent=1 // pred_fallthru
      _
    // Predicated region
    $region18: #{tpu_custom_call.1} parent=1 // pred_check
      _
    $region19: #{tpu_custom_call.1} parent=1 // pred_check_branch
      %23 = sbr.rel (0) target = $region21
    $region20: #{tpu_custom_call.1} parent=1 // pred_region
      _
    $region21: #{tpu_custom_call.1} parent=1 // pred_fallthru
      _
    %v24 = vld [vmem:[%s0] sm:$0xff]
    %v25 = vld [vmem:[%s0 + $0x8] sm:$0xff]
    %v28 = vcombine.high %v24, %v24
    %v29 = vcombine.high %v25, %v25
    %vm32 = vcmask 1043456
    %v33 = vsel %vm32, %v24, 0.0
    %v34 = vsel %vm32, %v25, 0.0
    %v35 = vadd.f32 %v33, %v34
    %v36 = vsel %vm32, %v28, 0.0
    %v37 = vsel %vm32, %v29, 0.0
    %v38 = vadd.f32 %v36, %v37
    %v39 = vmul.f32 %v24, %v24
    %v40 = vmul.f32 %v25, %v25
    %v43 = vcombine.high %v39, %v39
    %v44 = vcombine.high %v40, %v40
    %v47 = vsel %vm32, %v39, 0.0
    %v48 = vsel %vm32, %v40, 0.0
    %v49 = vadd.f32 %v47, %v48
    %v50 = vsel %vm32, %v43, 0.0
    %v51 = vsel %vm32, %v44, 0.0
    %v52 = vadd.f32 %v50, %v51
    %v53 = vsel %vm32, %v35, 0.0
    %v54 = vsel %vm32, %v38, 0.0
    %v55 = vadd.f32 %v53, %v54
    %56 = vadd.xlane.f32.xlu0 %v55
    %v57 = vpop.xlane.xlu0 %56
    %v58 = vsel %vm32, %v49, 0.0
    %v59 = vsel %vm32, %v52, 0.0
    %v60 = vadd.f32 %v58, %v59
    %61 = vadd.xlane.f32.xlu0 %v60
    %v62 = vpop.xlane.xlu0 %61
    %v63 = vld [vmem:[%s1] sm:$0xf]
    %v64 = vld [vmem:[%s2] sm:$0xf]
    %v65 = vld [vmem:[%s3] sm:$0xf]
    %v66 = vld [vmem:[%s4] sm:$0xf]
    %v67 = vmul.f32 %v57, 0.001953125
    %v68 = vmul.f32 %v57, %v67
    %v69 = vsub.f32 %v62, %v68
    %v70 = vmax.f32 %v69, 0.0
    %v71 = vmul.f32 %v70, 0.0019569471
    %v72 = vmul.f32 %v70, 0.001953125
    %v73 = vadd.f32 %v72, 1e-05
    %v74 = vrsqrt.pop %v73
    %v75 = vmul.f32 %v63, %v74
    %v76 = vmul.f32 %v67, %v75
    %v77 = vsub.f32 %v64, %v76
    %v78 = vmul.f32 %v65, 0.9
    %v79 = vmul.f32 %v67, 0.1
    %v80 = vadd.f32 %v78, %v79
    %v81 = vmul.f32 %v66, 0.9
    %v82 = vmul.f32 %v71, 0.1
    %v83 = vadd.f32 %v81, %v82
    %85 = vset.pattern.permute.xlu0 0
    %86 = vperm.xlu0 %85, %v75
    %v87 = vpop.permute.xlu0 %86
    %v89 = vunpack.c.l.s4 839922192
    %v90 = vunpack.c.0.s8 %v89
    %v91 = vlaneseq
    %v92 = vshrl.u32 %v91, 7
    %v93 = vsub.s32 %v90, %v92
    %v94 = vrot.slane %v87, %v93
    %v96 = vmul.f32 %v24, %v94
    %v97 = vmul.f32 %v25, %v94
    %99 = vset.pattern.permute.xlu0 0
    %100 = vperm.xlu0 %99, %v77
    %v101 = vpop.permute.xlu0 %100
    %v103 = vunpack.c.l.s4 839922192
    %v104 = vunpack.c.0.s8 %v103
    %v105 = vlaneseq
    %v106 = vshrl.u32 %v105, 7
    %v107 = vsub.s32 %v104, %v106
    %v108 = vrot.slane %v101, %v107
    %v110 = vadd.f32 %v96, %v108
    %v111 = vadd.f32 %v97, %v108
    %112 = vst [vmem:[#allocation2] sm:$0xff] %v110
    %113 = vst [vmem:[#allocation2 + $0x8] sm:$0xff] %v111
    %vm114 = vcmask 3072
    %115 = vst.msk [vmem:[%s6] sm:$0xf] %vm114, %v80
    %116 = vst.msk [vmem:[%s7] sm:$0xf] %vm114, %v83
    // Predicated region
    $region22: #{tpu_custom_call.1} parent=1 // pred_check
      _
    $region23: #{tpu_custom_call.1} parent=1 // pred_check_branch
      %118 = sbr.rel (0) target = $region25
    $region24: #{tpu_custom_call.1} parent=1 // pred_region
      %s120 = ssub.s32 256, 256
      %121 = vsyncadd [#allocation3], %s120
      %s122 = sshll.u32 [#allocation2], 4
      %s123 = int_to_ptr.vmem [resolvable:$true] %s122
      %128 = dma.vmem_to_hbm [thread:$0]  %s123, 256, %s5, [#allocation3], 128, 128, 8
    $region25: #{tpu_custom_call.1} parent=1 // pred_fallthru
      _
    // Predicated region
    $region26: #{tpu_custom_call.1} parent=1 // pred_check
      _
    $region27: #{tpu_custom_call.1} parent=1 // pred_check_branch
      %130 = sbr.rel (0) target = $region29
    $region28: #{tpu_custom_call.1} parent=1 // pred_region
      _
    $region29: #{tpu_custom_call.1} parent=1 // pred_fallthru
      _
    // Predicated region
    $region30: #{tpu_custom_call.1} parent=1 // pred_check
      _
    $region31: #{tpu_custom_call.1} parent=1 // pred_check_branch
      %132 = sbr.rel (0) target = $region33
    $region32: #{tpu_custom_call.1} parent=1 // pred_region
      _
    $region33: #{tpu_custom_call.1} parent=1 // pred_fallthru
      _
    // Predicated region
    $region34: #{tpu_custom_call.1} parent=1 // pred_check
      _
    $region35: #{tpu_custom_call.1} parent=1 // pred_check_branch
      %134 = sbr.rel (0) target = $region37
    $region36: #{tpu_custom_call.1} parent=1 // pred_region
      %135 = dma.done [#allocation3], 256
    $region37: #{tpu_custom_call.1} parent=1 // pred_fallthru
      _
    // Predicated region
    $region38: #{tpu_custom_call.1} parent=1 // pred_check
      _
    $region39: #{tpu_custom_call.1} parent=1 // pred_check_branch
      %137 = sbr.rel (0) target = $region41
    $region40: #{tpu_custom_call.1} parent=1 // pred_region
      _
    $region41: #{tpu_custom_call.1} parent=1 // pred_fallthru
      _
    // Predicated region
    $region42: #{tpu_custom_call.1} parent=1 // pred_check
      _
    $region43: #{tpu_custom_call.1} parent=1 // pred_check_branch
      %139 = sbr.rel (0) target = $region45
    $region44: #{tpu_custom_call.1} parent=1 // pred_region
      _
    $region45: #{tpu_custom_call.1} parent=1 // pred_fallthru
      _
    %140 = vsyncpa [#allocation3], 1

</llo_original>
